<compile_context>
chip_gen: v6e
topology: v6e:2x2x1
jax: 0.10.0
libtpu: 0.0.40
codegen_flags: <defaults>
</compile_context>

<pallas_src>
import jax
import jax.numpy as jnp
from jax import lax
from jax.experimental import pallas as pl
from jax.experimental.pallas import tpu as pltpu


def _round_up(x, m):
    return ((x + m - 1) // m) * m


def _inception_kernel(x_ref, w_ref, o_ref):
    # Branch mean + bias are folded into w_ref; one MXU matmul, f32 accumulate.
    o_ref[...] = jnp.dot(x_ref[...], w_ref[...],
                         preferred_element_type=jnp.float32).astype(o_ref.dtype)


def inception_block_v1(x, weights, biases, *, row_block=512, compute_dtype=None):
    """x: [N, Cin, H, W] (NCHW). weights[i]: [Cout, Cin, 2i+1, 2i+1], biases[i]: [Cout].

    compute_dtype: set to jnp.bfloat16 on v6e/v7x to halve X HBM traffic and
    use the native bf16 MXU (f32 accumulation is kept in-kernel); default is
    the input dtype so the fp32 reference check below stays within 1e-4.
    """
    nk = len(weights)
    N, Cin, H, W = x.shape
    Cout = weights[0].shape[0]
    p = nk - 1
    K = 2 * p + 1
    out_dtype = x.dtype
    compute_dtype = jnp.dtype(compute_dtype) if compute_dtype is not None else x.dtype

    ckk = K * K * Cin
    ckk_pad = _round_up(ckk + 1, 128)     # +1 column carries the mean bias
    cout_pad = _round_up(Cout, 128)       # lane-dense output (unmasked stores)

    # ---- fold branch mean (+ bias) into a single weight matrix ----------
    w_pad = []
    for i, w in enumerate(weights):
        off = p - i
        wp = jnp.zeros((Cout, Cin, K, K), jnp.float32)
        wp = wp.at[:, :, off:off + w.shape[2], off:off + w.shape[3]].set(
            w.astype(jnp.float32))
        w_pad.append(wp)
    w_mean = jnp.mean(jnp.stack(w_pad, 0), axis=0)            # [Cout, Cin, K, K]
    w_mat = jnp.transpose(w_mean, (2, 3, 1, 0)).reshape(ckk, Cout)
    b_mean = jnp.mean(jnp.stack(biases, 0).astype(jnp.float32), axis=0)

    w_full = jnp.zeros((ckk_pad, cout_pad), jnp.float32)
    w_full = w_full.at[:ckk, :Cout].set(w_mat)
    w_full = w_full.at[ckk, :Cout].set(b_mean)                 # bias row
    w_full = w_full.astype(compute_dtype)

    # ---- im2col (wrapper glue) ------------------------------------------
    # TODO(synk): fuse the (kh, kw) tap loop into the kernel (halo DMA over a
    # padded NHWC buffer) to remove this K*K x HBM read blow-up; kernel-side
    # gains are currently capped by streaming x_mat from HBM.
    x_nhwc = jnp.transpose(x, (0, 2, 3, 1)).astype(compute_dtype)
    xp = jnp.pad(x_nhwc, ((0, 0), (p, p), (p, p), (0, 0)))
    cols = [xp[:, kh:kh + H, kw:kw + W, :] for kh in range(K) for kw in range(K)]
    patches = jnp.stack(cols, axis=3)                          # [N, H, W, K*K, Cin]
    rows = N * H * W
    x_mat = patches.reshape(rows, ckk)

    elt = jnp.dtype(compute_dtype).itemsize

    # ---- VMEM-budgeted row block (v7x has only 64 MiB physical VMEM) ----
    rb = max(8, min(row_block, _round_up(rows, 8)))
    budget = 48 * 1024 * 1024
    while rb > 8:
        need = (2 * rb * ckk_pad * elt            # double-buffered X tile
                + ckk_pad * cout_pad * elt        # resident weight matrix
                + 2 * rb * cout_pad * elt)        # double-buffered out tile
        if need <= budget:
            break
        rb = max(8, (rb // 2 // 8) * 8)
    # Prefer >=2 row blocks so the 'parallel' axis can shard across v7x's 2 TCs.
    if _round_up(rows, rb) // rb < 2 and rb % 16 == 0 and rows > 8:
        rb //= 2
    rows_pad = _round_up(rows, rb)

    x_full = jnp.zeros((rows_pad, ckk_pad), compute_dtype)
    x_full = x_full.at[:rows, :ckk].set(x_mat)
    x_full = x_full.at[:rows, ckk].set(1.0)                    # bias ones-column

    need = (2 * rb * ckk_pad * elt + ckk_pad * cout_pad * elt
            + 2 * rb * cout_pad * elt)
    vmem_limit = int(min(56 * 1024 * 1024,
                         max(32 * 1024 * 1024, need + (8 << 20))))

    out_flat = pl.pallas_call(
        _inception_kernel,
        out_shape=jax.ShapeDtypeStruct((rows_pad, cout_pad), out_dtype),
        grid_spec=pltpu.PrefetchScalarGridSpec(
            num_scalar_prefetch=0,
            grid=(rows_pad // rb,),
            in_specs=[
                pl.BlockSpec((rb, ckk_pad), lambda r: (r, 0)),
                pl.BlockSpec((ckk_pad, cout_pad), lambda r: (0, 0)),  # VMEM-resident
            ],
            out_specs=pl.BlockSpec((rb, cout_pad), lambda r: (r, 0)),
        ),
        compiler_params=pltpu.CompilerParams(
            dimension_semantics=("parallel",),
            vmem_limit_bytes=vmem_limit),
    )(x_full, w_full)

    out = out_flat[:rows, :Cout].reshape(N, H, W, Cout)
    return jnp.transpose(out, (0, 3, 1, 2))                    # back to NCHW


def init_params(key, in_channels, out_channels, num_kernels, dtype=jnp.float32):
    """Kaiming normal (fan_out, relu) weights, zero biases — as in _initialize_weights."""
    weights, biases = [], []
    for i in range(num_kernels):
        k = 2 * i + 1
        key, sub = jax.random.split(key)
        fan_out = out_channels * k * k
        std = (2.0 / fan_out) ** 0.5
        w = std * jax.random.normal(sub, (out_channels, in_channels, k, k), dtype)
        weights.append(w)
        biases.append(jnp.zeros((out_channels,), dtype))
    return weights, biases


def reference(x, weights, biases):
    """Pure-JAX reference matching the PyTorch forward exactly."""
    outs = []
    for w, b in zip(weights, biases):
        k = w.shape[-1]
        pad = (k - 1) // 2
        y = lax.conv_general_dilated(
            x, w, window_strides=(1, 1), padding=[(pad, pad), (pad, pad)],
            dimension_numbers=('NCHW', 'OIHW', 'NCHW'))
        outs.append(y + b[None, :, None, None])
    return jnp.mean(jnp.stack(outs, axis=-1), axis=-1)


if __name__ == "__main__":
    key = jax.random.PRNGKey(0)
    N, Cin, H, W = 2, 4, 16, 16
    Cout, num_kernels = 8, 6

    kx, kp = jax.random.split(key)
    x = jax.random.normal(kx, (N, Cin, H, W), jnp.float32)
    weights, biases = init_params(kp, Cin, Cout, num_kernels)

    out = inception_block_v1(x, weights, biases)
    out = jax.block_until_ready(out)

    ref = reference(x, weights, biases)
    assert out.shape == (N, Cout, H, W), out.shape
    err = float(jnp.max(jnp.abs(out - ref)))
    assert jnp.allclose(out, ref, atol=1e-4, rtol=1e-4), f"max abs err {err}"
    print("KERNEL_OK")
</pallas_src>

<mosaic_0001>
module attributes {stable_mosaic.version = 11 : i64} {
  func.func @_inception_kernel(%arg0: i32, %arg1: memref<256x512xf32, #tpu.memory_space<vmem>>, %arg2: memref<512x128xf32, #tpu.memory_space<vmem>>, %arg3: memref<256x128xf32, #tpu.memory_space<vmem>>) attributes {dimension_semantics = [#tpu.dimension_semantics<parallel>], iteration_bounds = array<i64: 2>, scalar_prefetch = 0 : i64, scratch_operands = 0 : i64, tpu.core_type = #tpu.core_type<tc>, window_params = [{transform_indices = @transform_0, window_bounds = array<i64: 256, 512>}, {pipeline_mode = #tpu.pipeline_mode<synchronous>, transform_indices = @transform_1, window_bounds = array<i64: 512, 128>}, {transform_indices = @transform_2, window_bounds = array<i64: 256, 128>}]} {
    %c0 = arith.constant 0 : index
    %c0_0 = arith.constant 0 : index
    %0 = vector.load %arg1[%c0, %c0_0] : memref<256x512xf32, #tpu.memory_space<vmem>>, vector<256x512xf32>
    %c0_1 = arith.constant 0 : index
    %c0_2 = arith.constant 0 : index
    %1 = vector.load %arg2[%c0_1, %c0_2] : memref<512x128xf32, #tpu.memory_space<vmem>>, vector<512x128xf32>
    %cst = arith.constant dense<0.000000e+00> : vector<256x128xf32>
    %2 = tpu.matmul %0, %1, %cst {dimension_numbers = #tpu.dot_dimension_numbers<[1], [0], [0], [1], [0, 0, 1, 1], [], []>} : vector<256x512xf32>, vector<512x128xf32>, vector<256x128xf32> -> vector<256x128xf32>
    %c0_3 = arith.constant 0 : index
    %c0_4 = arith.constant 0 : index
    %3 = vector.load %arg3[%c0_3, %c0_4] : memref<256x128xf32, #tpu.memory_space<vmem>>, vector<256x128xf32>
    tpu.vector_store %arg3[%c0_3, %c0_4], %2 {strides = array<i32>} : memref<256x128xf32, #tpu.memory_space<vmem>>, vector<256x128xf32>,
    return
  }
  func.func @transform_0(%arg0: i32) -> (i32, i32) {
    %c0_i32 = arith.constant 0 : i32
    %c0_i32_0 = arith.constant 0 : i32
    return %arg0, %c0_i32 : i32, i32
  }
  func.func @transform_1(%arg0: i32) -> (i32, i32) {
    %c0_i32 = arith.constant 0 : i32
    %c0_i32_0 = arith.constant 0 : i32
    %c0_i32_1 = arith.constant 0 : i32
    return %c0_i32, %c0_i32_0 : i32, i32
  }
  func.func @transform_2(%arg0: i32) -> (i32, i32) {
    %c0_i32 = arith.constant 0 : i32
    %c0_i32_0 = arith.constant 0 : i32
    return %arg0, %c0_i32 : i32, i32
  }
}

</mosaic_0001>

<llo_original>
// kernel: tpu_custom_call.1
$region0: #{tpu_custom_call.1}
  #allocation0 [shape = 'u32[]', space=smem, size = 0x4, offset = 0x4, fixed_abs, tag = 'smem constant byte address 0x4 - core index']
  #allocation1 [shape = 'u32[144,128]{1,0:T(1,128)}', space=vmem, size = 0x12000, scoped, tag = 'internal scratch']
  %s0 = inlined_call_operand.hbm [shape: f32[512,512], index: 0, kind: input, shape index: {}]
  %s1 = inlined_call_operand.hbm [shape: f32[512,128], index: 1, kind: input, shape index: {}]
  %s2 = inlined_call_operand.hbm [shape: f32[512,128], index: 2, kind: output, shape index: {}]
  %s3 = sld [smem:[#allocation0]]
  $region49: #{tpu_custom_call.1} parent=0
    _
  %s5 = ssub.s32 1, %s3
  %s6 = scalar_select 0, %s5, %s3
  $region1: #{tpu_custom_call.1} parent=0
    #allocation2 [shape = 'u8[1048576]{0}', space=vmem, size = 0x100000, scoped, tag = 'input window, operand 0']
    #allocation3 [shape = 's32[2]{0}', space=sflag, size = 0x8, scoped, tag = 'scoped memory for tpu_custom_call.1']
    #allocation4 [shape = 's32[2]{0}', space=sflag, size = 0x8, scoped, tag = 'scoped memory for tpu_custom_call.1']
    #allocation5 [shape = 'u8[262144]{0}', space=vmem, size = 0x40000, scoped, tag = 'input window, operand 1, single buffered']
    #allocation6 [shape = 's32[1]{0}', space=sflag, size = 0x4, scoped, tag = 'scoped memory for tpu_custom_call.1']
    #allocation7 [shape = 'u8[262144]{0}', space=vmem, size = 0x40000, scoped, tag = 'output window, operand 0']
    %7 = vsyncpa [#allocation3], 0
    %s8 = scalar_lea.sflag [#allocation3], 1
    %9 = vsyncpa %s8, 0
    %10 = vsyncpa [#allocation6], 0
    %11 = vsyncpa [#allocation4], 0
    %s12 = scalar_lea.sflag [#allocation4], 1
    %13 = vsyncpa %s12, 0
    loop: start=0, step=1, limit=4
    $region2: #{tpu_custom_call.1} parent=1 // loop_pre_header
      _
    $region3: #{tpu_custom_call.1} parent=1 // loop_header
      %s15 = sphi 0, %s19
      %p16 = scmp.ge.s32.totalorder %s15, 4
      %s25 = sphi 0, %s27
      %s28 = sphi 0, %s25
      %s29 = sphi 0, %s28
      %s45 = sphi 0, %s29
      %s49 = sphi 0, %s49
      %s51 = sphi 0, %s49
      %s52 = sphi 0, %s51
      %s66 = sphi 0, %s52
      %s72 = sphi 0, %s74
      %s75 = sphi 0, %s72
      %s76 = sphi 0, %s75
      %s92 = sphi 0, %s76
    $region4: #{tpu_custom_call.1} parent=1 // loop_header_branch
      %18 = sbr.rel (%p16) target = $region8
    $region5: #{tpu_custom_call.1} parent=1 // loop_body
      %s20 = ssub.s32 %s15, 1
      %s21 = ssub.s32 %s15, 2
      %s22 = sadd.s32 %s15, 1
      %s23 = ssub.s32 %s15, %s22
      %p24 = scmp.eq.s32.totalorder %s23, 0
      %s26 = sadd.s32 %s25, 1
      %s27 = scalar_select %p24, %s25, %s26
      %p30 = pneg %p24
      %p31 = scmp.eq.s32.totalorder %s15, 1
      %p32 = por %p30, %p31
      %p33 = scmp.ne.s32.totalorder %s25, %s28
      %p34 = scmp.eq.s32.totalorder %s15, 0
      %p35 = por %p33, %p34
      %p36 = scmp.ne.s32.totalorder %s25, %s28
      %p37 = scmp.eq.s32.totalorder %s20, 1
      %p38 = por %p36, %p37
      %p39 = scmp.ne.s32.totalorder %s28, %s29
      %p40 = scmp.eq.s32.totalorder %s20, 0
      %p41 = por %p39, %p40
      %p42 = scmp.ne.s32.totalorder %s28, %s29
      %p43 = scmp.eq.s32.totalorder %s21, 1
      %p44 = por %p42, %p43
      %p46 = scmp.ne.s32.totalorder %s29, %s45
      %p47 = scmp.eq.s32.totalorder %s21, 0
      %p48 = por %p46, %p47
      %s50 = sadd.s32 %s49, 1
      %p53 = scmp.eq.s32.totalorder %s15, 1
      %p54 = scmp.ne.s32.totalorder %s49, %s51
      %p55 = scmp.eq.s32.totalorder %s15, 0
      %p56 = por %p54, %p55
      %p57 = scmp.ne.s32.totalorder %s49, %s51
      %p58 = scmp.eq.s32.totalorder %s20, 1
      %p59 = por %p57, %p58
      %p60 = scmp.ne.s32.totalorder %s51, %s52
      %p61 = scmp.eq.s32.totalorder %s20, 0
      %p62 = por %p60, %p61
      %p63 = scmp.ne.s32.totalorder %s51, %s52
      %p64 = scmp.eq.s32.totalorder %s21, 1
      %p65 = por %p63, %p64
      %p67 = scmp.ne.s32.totalorder %s52, %s66
      %p68 = scmp.eq.s32.totalorder %s21, 0
      %p69 = por %p67, %p68
      %s70 = ssub.s32 %s15, %s22
      %p71 = scmp.eq.s32.totalorder %s70, 0
      %s73 = sadd.s32 %s72, 1
      %s74 = scalar_select %p71, %s72, %s73
      %p77 = pneg %p71
      %p78 = scmp.eq.s32.totalorder %s15, 1
      %p79 = por %p77, %p78
      %p80 = scmp.ne.s32.totalorder %s72, %s75
      %p81 = scmp.eq.s32.totalorder %s15, 0
      %p82 = por %p80, %p81
      %p83 = scmp.ne.s32.totalorder %s72, %s75
      %p84 = scmp.eq.s32.totalorder %s20, 1
      %p85 = por %p83, %p84
      %p86 = scmp.ne.s32.totalorder %s75, %s76
      %p87 = scmp.eq.s32.totalorder %s20, 0
      %p88 = por %p86, %p87
      %p89 = scmp.ne.s32.totalorder %s75, %s76
      %p90 = scmp.eq.s32.totalorder %s21, 1
      %p91 = por %p89, %p90
      %p93 = scmp.ne.s32.totalorder %s76, %s92
      %p94 = scmp.eq.s32.totalorder %s21, 0
      %p95 = por %p93, %p94
      %p96 = scmp.le.s32.totalorder 1, %s15
      %p97 = scmp.lt.s32.totalorder %s15, 3
      %p98 = pnand %p96, %p97
      %p99 = pneg %p98
      // Predicated region
      $region9: #{tpu_custom_call.1} parent=5 // pred_check
        _
      $region10: #{tpu_custom_call.1} parent=5 // pred_check_branch
        %101 = sbr.rel (%p98) target = $region12
      $region11: #{tpu_custom_call.1} parent=5 // pred_region
        %s102 = ssub.s32 %s15, 1
        // Predicated region
        $region13: #{tpu_custom_call.1} parent=11 // pred_check
          %p103 = pneg %p62
        $region14: #{tpu_custom_call.1} parent=11 // pred_check_branch
          %105 = sbr.rel (%p103) target = $region16
        $region15: #{tpu_custom_call.1} parent=11 // pred_region
          %s107 = ssub.s32 8192, 8192
          %108 = vsyncadd [#allocation6], %s107
          %s109 = sshll.u32 [#allocation5], 4
          %s110 = int_to_ptr.vmem [resolvable:$true] %s109
          %115 = dma.hbm_to_vmem [thread:$0]  %s1, 8192, %s110, [#allocation6], 128, 128, 8
        $region16: #{tpu_custom_call.1} parent=11 // pred_fallthru
          _
      $region12: #{tpu_custom_call.1} parent=5 // pred_fallthru
        _
      %p116 = scmp.lt.s32.totalorder %s15, 2
      // Predicated region
      $region17: #{tpu_custom_call.1} parent=5 // pred_check
        %p117 = pneg %p116
      $region18: #{tpu_custom_call.1} parent=5 // pred_check_branch
        %119 = sbr.rel (%p117) target = $region20
      $region19: #{tpu_custom_call.1} parent=5 // pred_region
        // Predicated region
        $region21: #{tpu_custom_call.1} parent=19 // pred_check
          %p120 = pneg %p35
        $region22: #{tpu_custom_call.1} parent=19 // pred_check_branch
          %122 = sbr.rel (%p120) target = $region24
        $region23: #{tpu_custom_call.1} parent=19 // pred_region
          %s123 = sand.u32 %s25, 1
          %s124 = scalar_lea.sflag [#allocation3], %s123
          %s125 = sand.u32 %s25, 1
          %s126 = smul.addr %s125, 1024
          %s127 = scalar_lea.vmem [#allocation2], %s126
          %s128 = smul.u32 32, %s15
          %s130 = ssub.s32 16384, 16384
          %131 = vsyncadd %s124, %s130
          %s132 = smul.addr %s128, 4
          %s133 = smul.addr %s132, 128
          %s134 = scalar_lea.hbm %s0, %s133
          %s135 = sshll.u32 %s127, 4
          %s136 = int_to_ptr.vmem [resolvable:$true] %s135
          %141 = dma.hbm_to_vmem [thread:$0]  %s134, 16384, %s136, %s124, 512, 512, 32
        $region24: #{tpu_custom_call.1} parent=19 // pred_fallthru
          _
      $region20: #{tpu_custom_call.1} parent=5 // pred_fallthru
        _
      %p142 = scmp.le.s32.totalorder 1, %s15
      %p143 = scmp.lt.s32.totalorder %s15, 3
      %p144 = pnand %p142, %p143
      %p145 = pneg %p144
      // Predicated region
      $region25: #{tpu_custom_call.1} parent=5 // pred_check
        _
      $region26: #{tpu_custom_call.1} parent=5 // pred_check_branch
        %147 = sbr.rel (%p144) target = $region28
      $region27: #{tpu_custom_call.1} parent=5 // pred_region
        %s148 = ssub.s32 %s15, 1
        %s149 = sand.u32 %s28, 1
        %s150 = scalar_lea.sflag [#allocation3], %s149
        %s151 = sand.u32 %s28, 1
        %s152 = smul.addr %s151, 1024
        %s153 = scalar_lea.vmem [#allocation2], %s152
        // Predicated region
        $region29: #{tpu_custom_call.1} parent=27 // pred_check
          %p154 = pneg %p41
        $region30: #{tpu_custom_call.1} parent=27 // pred_check_branch
          %156 = sbr.rel (%p154) target = $region32
        $region31: #{tpu_custom_call.1} parent=27 // pred_region
          %157 = dma.done %s150, 16384
        $region32: #{tpu_custom_call.1} parent=27 // pred_fallthru
          _
        // Predicated region
        $region33: #{tpu_custom_call.1} parent=27 // pred_check
          %p158 = pneg %p62
        $region34: #{tpu_custom_call.1} parent=27 // pred_check_branch
          %160 = sbr.rel (%p158) target = $region36
        $region35: #{tpu_custom_call.1} parent=27 // pred_region
          %161 = dma.done [#allocation6], 8192
        $region36: #{tpu_custom_call.1} parent=27 // pred_fallthru
          _
        %s162 = sand.u32 %s28, 1
        %s163 = scalar_lea.sflag [#allocation3], %s162
        %s164 = sand.u32 %s28, 1
        %s165 = smul.addr %s164, 1024
        %s166 = scalar_lea.vmem [#allocation2], %s165
        %p167 = pneg %p41
        %p168 = pneg %p38
        %p169 = pneg %p62
        %p170 = pneg %p59
        %p171 = pneg %p88
        %p172 = pneg %p85
        %s173 = sand.u32 %s75, 1
        %s174 = scalar_lea.sflag [#allocation4], %s173
        %s175 = sand.u32 %s75, 1
        %s176 = smul.addr %s175, 256
        %s177 = scalar_lea.vmem [#allocation7], %s176
        %s178 = smul.u32 32, %s20
        %s179 = smul.u32 32, %s20
        %v180 = vld [vmem:[%s153] sm:$0xff]
        %v181 = vld [vmem:[%s153 + $0x8] sm:$0xff]
        %v182 = vld [vmem:[%s153 + $0x10] sm:$0xff]
        %v183 = vld [vmem:[%s153 + $0x18] sm:$0xff]
        %v184 = vld [vmem:[%s153 + $0x20] sm:$0xff]
        %v185 = vld [vmem:[%s153 + $0x28] sm:$0xff]
        %v186 = vld [vmem:[%s153 + $0x30] sm:$0xff]
        %v187 = vld [vmem:[%s153 + $0x38] sm:$0xff]
        %v188 = vld [vmem:[%s153 + $0x40] sm:$0xff]
        %v189 = vld [vmem:[%s153 + $0x48] sm:$0xff]
        %v190 = vld [vmem:[%s153 + $0x50] sm:$0xff]
        %v191 = vld [vmem:[%s153 + $0x58] sm:$0xff]
        %v192 = vld [vmem:[%s153 + $0x60] sm:$0xff]
        %v193 = vld [vmem:[%s153 + $0x68] sm:$0xff]
        %v194 = vld [vmem:[%s153 + $0x70] sm:$0xff]
        %v195 = vld [vmem:[%s153 + $0x78] sm:$0xff]
        %v196 = vld [vmem:[%s153 + $0x80] sm:$0xff]
        %v197 = vld [vmem:[%s153 + $0x88] sm:$0xff]
        %v198 = vld [vmem:[%s153 + $0x90] sm:$0xff]
        %v199 = vld [vmem:[%s153 + $0x98] sm:$0xff]
        %v200 = vld [vmem:[%s153 + $0xa0] sm:$0xff]
        %v201 = vld [vmem:[%s153 + $0xa8] sm:$0xff]
        %v202 = vld [vmem:[%s153 + $0xb0] sm:$0xff]
        %v203 = vld [vmem:[%s153 + $0xb8] sm:$0xff]
        %v204 = vld [vmem:[%s153 + $0xc0] sm:$0xff]
        %v205 = vld [vmem:[%s153 + $0xc8] sm:$0xff]
        %v206 = vld [vmem:[%s153 + $0xd0] sm:$0xff]
        %v207 = vld [vmem:[%s153 + $0xd8] sm:$0xff]
        %v208 = vld [vmem:[%s153 + $0xe0] sm:$0xff]
        %v209 = vld [vmem:[%s153 + $0xe8] sm:$0xff]
        %v210 = vld [vmem:[%s153 + $0xf0] sm:$0xff]
        %v211 = vld [vmem:[%s153 + $0xf8] sm:$0xff]
        %v212 = vld [vmem:[%s153 + $0x100] sm:$0xff]
        %v213 = vld [vmem:[%s153 + $0x108] sm:$0xff]
        %v214 = vld [vmem:[%s153 + $0x110] sm:$0xff]
        %v215 = vld [vmem:[%s153 + $0x118] sm:$0xff]
        %v216 = vld [vmem:[%s153 + $0x120] sm:$0xff]
        %v217 = vld [vmem:[%s153 + $0x128] sm:$0xff]
        %v218 = vld [vmem:[%s153 + $0x130] sm:$0xff]
        %v219 = vld [vmem:[%s153 + $0x138] sm:$0xff]
        %v220 = vld [vmem:[%s153 + $0x140] sm:$0xff]
        %v221 = vld [vmem:[%s153 + $0x148] sm:$0xff]
        %v222 = vld [vmem:[%s153 + $0x150] sm:$0xff]
        %v223 = vld [vmem:[%s153 + $0x158] sm:$0xff]
        %v224 = vld [vmem:[%s153 + $0x160] sm:$0xff]
        %v225 = vld [vmem:[%s153 + $0x168] sm:$0xff]
        %v226 = vld [vmem:[%s153 + $0x170] sm:$0xff]
        %v227 = vld [vmem:[%s153 + $0x178] sm:$0xff]
        %v228 = vld [vmem:[%s153 + $0x180] sm:$0xff]
        %v229 = vld [vmem:[%s153 + $0x188] sm:$0xff]
        %v230 = vld [vmem:[%s153 + $0x190] sm:$0xff]
        %v231 = vld [vmem:[%s153 + $0x198] sm:$0xff]
        %v232 = vld [vmem:[%s153 + $0x1a0] sm:$0xff]
        %v233 = vld [vmem:[%s153 + $0x1a8] sm:$0xff]
        %v234 = vld [vmem:[%s153 + $0x1b0] sm:$0xff]
        %v235 = vld [vmem:[%s153 + $0x1b8] sm:$0xff]
        %v236 = vld [vmem:[%s153 + $0x1c0] sm:$0xff]
        %v237 = vld [vmem:[%s153 + $0x1c8] sm:$0xff]
        %v238 = vld [vmem:[%s153 + $0x1d0] sm:$0xff]
        %v239 = vld [vmem:[%s153 + $0x1d8] sm:$0xff]
        %v240 = vld [vmem:[%s153 + $0x1e0] sm:$0xff]
        %v241 = vld [vmem:[%s153 + $0x1e8] sm:$0xff]
        %v242 = vld [vmem:[%s153 + $0x1f0] sm:$0xff]
        %v243 = vld [vmem:[%s153 + $0x1f8] sm:$0xff]
        %v244 = vld [vmem:[%s153 + $0x200] sm:$0xff]
        %v245 = vld [vmem:[%s153 + $0x208] sm:$0xff]
        %v246 = vld [vmem:[%s153 + $0x210] sm:$0xff]
        %v247 = vld [vmem:[%s153 + $0x218] sm:$0xff]
        %v248 = vld [vmem:[%s153 + $0x220] sm:$0xff]
        %v249 = vld [vmem:[%s153 + $0x228] sm:$0xff]
        %v250 = vld [vmem:[%s153 + $0x230] sm:$0xff]
        %v251 = vld [vmem:[%s153 + $0x238] sm:$0xff]
        %v252 = vld [vmem:[%s153 + $0x240] sm:$0xff]
        %v253 = vld [vmem:[%s153 + $0x248] sm:$0xff]
        %v254 = vld [vmem:[%s153 + $0x250] sm:$0xff]
        %v255 = vld [vmem:[%s153 + $0x258] sm:$0xff]
        %v256 = vld [vmem:[%s153 + $0x260] sm:$0xff]
        %v257 = vld [vmem:[%s153 + $0x268] sm:$0xff]
        %v258 = vld [vmem:[%s153 + $0x270] sm:$0xff]
        %v259 = vld [vmem:[%s153 + $0x278] sm:$0xff]
        %v260 = vld [vmem:[%s153 + $0x280] sm:$0xff]
        %v261 = vld [vmem:[%s153 + $0x288] sm:$0xff]
        %v262 = vld [vmem:[%s153 + $0x290] sm:$0xff]
        %v263 = vld [vmem:[%s153 + $0x298] sm:$0xff]
        %v264 = vld [vmem:[%s153 + $0x2a0] sm:$0xff]
        %v265 = vld [vmem:[%s153 + $0x2a8] sm:$0xff]
        %v266 = vld [vmem:[%s153 + $0x2b0] sm:$0xff]
        %v267 = vld [vmem:[%s153 + $0x2b8] sm:$0xff]
        %v268 = vld [vmem:[%s153 + $0x2c0] sm:$0xff]
        %v269 = vld [vmem:[%s153 + $0x2c8] sm:$0xff]
        %v270 = vld [vmem:[%s153 + $0x2d0] sm:$0xff]
        %v271 = vld [vmem:[%s153 + $0x2d8] sm:$0xff]
        %v272 = vld [vmem:[%s153 + $0x2e0] sm:$0xff]
        %v273 = vld [vmem:[%s153 + $0x2e8] sm:$0xff]
        %v274 = vld [vmem:[%s153 + $0x2f0] sm:$0xff]
        %v275 = vld [vmem:[%s153 + $0x2f8] sm:$0xff]
        %v276 = vld [vmem:[%s153 + $0x300] sm:$0xff]
        %v277 = vld [vmem:[%s153 + $0x308] sm:$0xff]
        %v278 = vld [vmem:[%s153 + $0x310] sm:$0xff]
        %v279 = vld [vmem:[%s153 + $0x318] sm:$0xff]
        %v280 = vld [vmem:[%s153 + $0x320] sm:$0xff]
        %v281 = vld [vmem:[%s153 + $0x328] sm:$0xff]
        %v282 = vld [vmem:[%s153 + $0x330] sm:$0xff]
        %v283 = vld [vmem:[%s153 + $0x338] sm:$0xff]
        %v284 = vld [vmem:[%s153 + $0x340] sm:$0xff]
        %v285 = vld [vmem:[%s153 + $0x348] sm:$0xff]
        %v286 = vld [vmem:[%s153 + $0x350] sm:$0xff]
        %v287 = vld [vmem:[%s153 + $0x358] sm:$0xff]
        %v288 = vld [vmem:[%s153 + $0x360] sm:$0xff]
        %v289 = vld [vmem:[%s153 + $0x368] sm:$0xff]
        %v290 = vld [vmem:[%s153 + $0x370] sm:$0xff]
        %v291 = vld [vmem:[%s153 + $0x378] sm:$0xff]
        %v292 = vld [vmem:[%s153 + $0x380] sm:$0xff]
        %v293 = vld [vmem:[%s153 + $0x388] sm:$0xff]
        %v294 = vld [vmem:[%s153 + $0x390] sm:$0xff]
        %v295 = vld [vmem:[%s153 + $0x398] sm:$0xff]
        %v296 = vld [vmem:[%s153 + $0x3a0] sm:$0xff]
        %v297 = vld [vmem:[%s153 + $0x3a8] sm:$0xff]
        %v298 = vld [vmem:[%s153 + $0x3b0] sm:$0xff]
        %v299 = vld [vmem:[%s153 + $0x3b8] sm:$0xff]
        %v300 = vld [vmem:[%s153 + $0x3c0] sm:$0xff]
        %v301 = vld [vmem:[%s153 + $0x3c8] sm:$0xff]
        %v302 = vld [vmem:[%s153 + $0x3d0] sm:$0xff]
        %v303 = vld [vmem:[%s153 + $0x3d8] sm:$0xff]
        %v304 = vld [vmem:[%s153 + $0x3e0] sm:$0xff]
        %v305 = vld [vmem:[%s153 + $0x3e8] sm:$0xff]
        %v306 = vld [vmem:[%s153 + $0x3f0] sm:$0xff]
        %v307 = vld [vmem:[%s153 + $0x3f8] sm:$0xff]
        %v308 = vld [vmem:[#allocation5] sm:$0xff]
        %v309 = vld [vmem:[#allocation5 + $0x8] sm:$0xff]
        %v310 = vld [vmem:[#allocation5 + $0x10] sm:$0xff]
        %v311 = vld [vmem:[#allocation5 + $0x18] sm:$0xff]
        %v312 = vld [vmem:[#allocation5 + $0x20] sm:$0xff]
        %v313 = vld [vmem:[#allocation5 + $0x28] sm:$0xff]
        %v314 = vld [vmem:[#allocation5 + $0x30] sm:$0xff]
        %v315 = vld [vmem:[#allocation5 + $0x38] sm:$0xff]
        %v316 = vld [vmem:[#allocation5 + $0x40] sm:$0xff]
        %v317 = vld [vmem:[#allocation5 + $0x48] sm:$0xff]
        %v318 = vld [vmem:[#allocation5 + $0x50] sm:$0xff]
        %v319 = vld [vmem:[#allocation5 + $0x58] sm:$0xff]
        %v320 = vld [vmem:[#allocation5 + $0x60] sm:$0xff]
        %v321 = vld [vmem:[#allocation5 + $0x68] sm:$0xff]
        %v322 = vld [vmem:[#allocation5 + $0x70] sm:$0xff]
        %v323 = vld [vmem:[#allocation5 + $0x78] sm:$0xff]
        %v324 = vld [vmem:[#allocation5 + $0x80] sm:$0xff]
        %v325 = vld [vmem:[#allocation5 + $0x88] sm:$0xff]
        %v326 = vld [vmem:[#allocation5 + $0x90] sm:$0xff]
        %v327 = vld [vmem:[#allocation5 + $0x98] sm:$0xff]
        %v328 = vld [vmem:[#allocation5 + $0xa0] sm:$0xff]
        %v329 = vld [vmem:[#allocation5 + $0xa8] sm:$0xff]
        %v330 = vld [vmem:[#allocation5 + $0xb0] sm:$0xff]
        %v331 = vld [vmem:[#allocation5 + $0xb8] sm:$0xff]
        %v332 = vld [vmem:[#allocation5 + $0xc0] sm:$0xff]
        %v333 = vld [vmem:[#allocation5 + $0xc8] sm:$0xff]
        %v334 = vld [vmem:[#allocation5 + $0xd0] sm:$0xff]
        %v335 = vld [vmem:[#allocation5 + $0xd8] sm:$0xff]
        %v336 = vld [vmem:[#allocation5 + $0xe0] sm:$0xff]
        %v337 = vld [vmem:[#allocation5 + $0xe8] sm:$0xff]
        %v338 = vld [vmem:[#allocation5 + $0xf0] sm:$0xff]
        %v339 = vld [vmem:[#allocation5 + $0xf8] sm:$0xff]
        %v340 = vld [vmem:[#allocation5 + $0x100] sm:$0xff]
        %v341 = vld [vmem:[#allocation5 + $0x108] sm:$0xff]
        %v342 = vld [vmem:[#allocation5 + $0x110] sm:$0xff]
        %v343 = vld [vmem:[#allocation5 + $0x118] sm:$0xff]
        %v344 = vld [vmem:[#allocation5 + $0x120] sm:$0xff]
        %v345 = vld [vmem:[#allocation5 + $0x128] sm:$0xff]
        %v346 = vld [vmem:[#allocation5 + $0x130] sm:$0xff]
        %v347 = vld [vmem:[#allocation5 + $0x138] sm:$0xff]
        %v348 = vld [vmem:[#allocation5 + $0x140] sm:$0xff]
        %v349 = vld [vmem:[#allocation5 + $0x148] sm:$0xff]
        %v350 = vld [vmem:[#allocation5 + $0x150] sm:$0xff]
        %v351 = vld [vmem:[#allocation5 + $0x158] sm:$0xff]
        %v352 = vld [vmem:[#allocation5 + $0x160] sm:$0xff]
        %v353 = vld [vmem:[#allocation5 + $0x168] sm:$0xff]
        %v354 = vld [vmem:[#allocation5 + $0x170] sm:$0xff]
        %v355 = vld [vmem:[#allocation5 + $0x178] sm:$0xff]
        %v356 = vld [vmem:[#allocation5 + $0x180] sm:$0xff]
        %v357 = vld [vmem:[#allocation5 + $0x188] sm:$0xff]
        %v358 = vld [vmem:[#allocation5 + $0x190] sm:$0xff]
        %v359 = vld [vmem:[#allocation5 + $0x198] sm:$0xff]
        %v360 = vld [vmem:[#allocation5 + $0x1a0] sm:$0xff]
        %v361 = vld [vmem:[#allocation5 + $0x1a8] sm:$0xff]
        %v362 = vld [vmem:[#allocation5 + $0x1b0] sm:$0xff]
        %v363 = vld [vmem:[#allocation5 + $0x1b8] sm:$0xff]
        %v364 = vld [vmem:[#allocation5 + $0x1c0] sm:$0xff]
        %v365 = vld [vmem:[#allocation5 + $0x1c8] sm:$0xff]
        %v366 = vld [vmem:[#allocation5 + $0x1d0] sm:$0xff]
        %v367 = vld [vmem:[#allocation5 + $0x1d8] sm:$0xff]
        %v368 = vld [vmem:[#allocation5 + $0x1e0] sm:$0xff]
        %v369 = vld [vmem:[#allocation5 + $0x1e8] sm:$0xff]
        %v370 = vld [vmem:[#allocation5 + $0x1f0] sm:$0xff]
        %v371 = vld [vmem:[#allocation5 + $0x1f8] sm:$0xff]
        %372 = vmatprep.subr.mxu0 0.0
        %373 = vmatpush1.msra.mxu0 %v323
        %374 = vmatprep.subr.mxu0 0.0
        %375 = vmatpush1.msra.mxu0 %v322
        %376 = vmatprep.subr.mxu0 0.0
        %377 = vmatpush1.msra.mxu0 %v321
        %378 = vmatprep.subr.mxu0 0.0
        %379 = vmatpush1.msra.mxu0 %v320
        %380 = vmatprep.subr.mxu0 0.0
        %381 = vmatpush1.msra.mxu0 %v319
        %382 = vmatprep.subr.mxu0 0.0
        %383 = vmatpush1.msra.mxu0 %v318
        %384 = vmatprep.subr.mxu0 0.0
        %385 = vmatpush1.msra.mxu0 %v317
        %386 = vmatprep.subr.mxu0 0.0
        %387 = vmatpush1.msra.mxu0 %v316
        %388 = vmatprep.subr.mxu0 0.0
        %389 = vmatpush1.msra.mxu0 %v315
        %390 = vmatprep.subr.mxu0 0.0
        %391 = vmatpush1.msra.mxu0 %v314
        %392 = vmatprep.subr.mxu0 0.0
        %393 = vmatpush1.msra.mxu0 %v313
        %394 = vmatprep.subr.mxu0 0.0
        %395 = vmatpush1.msra.mxu0 %v312
        %396 = vmatprep.subr.mxu0 0.0
        %397 = vmatpush1.msra.mxu0 %v311
        %398 = vmatprep.subr.mxu0 0.0
        %399 = vmatpush1.msra.mxu0 %v310
        %400 = vmatprep.subr.mxu0 0.0
        %401 = vmatpush1.msra.mxu0 %v309
        %402 = vmatprep.subr.mxu0 0.0
        %403 = vmatpush1.msra.mxu0 %v308
        %404 = vmatprep.subr.mxu0 0.0
        %405 = vmatpush2.msra.mxu0 %v339
        %406 = vmatprep.subr.mxu0 0.0
        %407 = vmatpush2.msra.mxu0 %v338
        %408 = vmatprep.subr.mxu0 0.0
        %409 = vmatpush2.msra.mxu0 %v337
        %410 = vmatprep.subr.mxu0 0.0
        %411 = vmatpush2.msra.mxu0 %v336
        %412 = vmatprep.subr.mxu0 0.0
        %413 = vmatpush2.msra.mxu0 %v335
        %414 = vmatprep.subr.mxu0 0.0
        %415 = vmatpush2.msra.mxu0 %v334
        %416 = vmatprep.subr.mxu0 0.0
        %417 = vmatpush2.msra.mxu0 %v333
        %418 = vmatprep.subr.mxu0 0.0
        %419 = vmatpush2.msra.mxu0 %v332
        %420 = vmatprep.subr.mxu0 0.0
        %421 = vmatpush2.msra.mxu0 %v331
        %422 = vmatprep.subr.mxu0 0.0
        %423 = vmatpush2.msra.mxu0 %v330
        %424 = vmatprep.subr.mxu0 0.0
        %425 = vmatpush2.msra.mxu0 %v329
        %426 = vmatprep.subr.mxu0 0.0
        %427 = vmatpush2.msra.mxu0 %v328
        %428 = vmatprep.subr.mxu0 0.0
        %429 = vmatpush2.msra.mxu0 %v327
        %430 = vmatprep.subr.mxu0 0.0
        %431 = vmatpush2.msra.mxu0 %v326
        %432 = vmatprep.subr.mxu0 0.0
        %433 = vmatpush2.msra.mxu0 %v325
        %434 = vmatprep.subr.mxu0 0.0
        %435 = vmatpush2.msra.mxu0 %v324
        %436 = vmatprep.mubr.f32.mxu0 %v181
        %437 = vmatmul.mubr.f32.gmra.mxu0 %v180
        %v438 = vpop.f32.mrf.mxu0
        %v439 = vadd.f32 0.0, %v438
        %v440 = vpop.f32.mrf.mxu0
        %441 = vmatprep.mubr.f32.mxu0 %v185
        %442 = vmatmul.mubr.f32.gmra.mxu0 %v184
        %v443 = vpop.f32.mrf.mxu0
        %v444 = vadd.f32 0.0, %v443
        %v445 = vpop.f32.mrf.mxu0
        %446 = vmatprep.mubr.f32.mxu0 %v189
        %447 = vmatmul.mubr.f32.gmra.mxu0 %v188
        %v448 = vpop.f32.mrf.mxu0
        %v449 = vadd.f32 0.0, %v448
        %v450 = vpop.f32.mrf.mxu0
        %451 = vmatprep.mubr.f32.mxu0 %v193
        %452 = vmatmul.mubr.f32.gmra.mxu0 %v192
        %v453 = vpop.f32.mrf.mxu0
        %v454 = vadd.f32 0.0, %v453
        %v455 = vpop.f32.mrf.mxu0
        %456 = vmatprep.mubr.f32.mxu0 %v197
        %457 = vmatmul.mubr.f32.gmra.mxu0 %v196
        %v458 = vpop.f32.mrf.mxu0
        %v459 = vadd.f32 0.0, %v458
        %v460 = vpop.f32.mrf.mxu0
        %461 = vmatprep.mubr.f32.mxu0 %v201
        %462 = vmatmul.mubr.f32.gmra.mxu0 %v200
        %v463 = vpop.f32.mrf.mxu0
        %v464 = vadd.f32 0.0, %v463
        %v465 = vpop.f32.mrf.mxu0
        %466 = vmatprep.mubr.f32.mxu0 %v205
        %467 = vmatmul.mubr.f32.gmra.mxu0 %v204
        %v468 = vpop.f32.mrf.mxu0
        %v469 = vadd.f32 0.0, %v468
        %v470 = vpop.f32.mrf.mxu0
        %471 = vmatprep.mubr.f32.mxu0 %v209
        %472 = vmatmul.mubr.f32.gmra.mxu0 %v208
        %v473 = vpop.f32.mrf.mxu0
        %v474 = vadd.f32 0.0, %v473
        %v475 = vpop.f32.mrf.mxu0
        %476 = vmatprep.mubr.f32.mxu0 %v213
        %477 = vmatmul.mubr.f32.gmra.mxu0 %v212
        %v478 = vpop.f32.mrf.mxu0
        %v479 = vadd.f32 0.0, %v478
        %v480 = vpop.f32.mrf.mxu0
        %481 = vmatprep.mubr.f32.mxu0 %v217
        %482 = vmatmul.mubr.f32.gmra.mxu0 %v216
        %v483 = vpop.f32.mrf.mxu0
        %v484 = vadd.f32 0.0, %v483
        %v485 = vpop.f32.mrf.mxu0
        %486 = vmatprep.mubr.f32.mxu0 %v221
        %487 = vmatmul.mubr.f32.gmra.mxu0 %v220
        %v488 = vpop.f32.mrf.mxu0
        %v489 = vadd.f32 0.0, %v488
        %v490 = vpop.f32.mrf.mxu0
        %491 = vmatprep.mubr.f32.mxu0 %v225
        %492 = vmatmul.mubr.f32.gmra.mxu0 %v224
        %v493 = vpop.f32.mrf.mxu0
        %v494 = vadd.f32 0.0, %v493
        %v495 = vpop.f32.mrf.mxu0
        %496 = vmatprep.mubr.f32.mxu0 %v229
        %497 = vmatmul.mubr.f32.gmra.mxu0 %v228
        %v498 = vpop.f32.mrf.mxu0
        %v499 = vadd.f32 0.0, %v498
        %v500 = vpop.f32.mrf.mxu0
        %501 = vmatprep.mubr.f32.mxu0 %v233
        %502 = vmatmul.mubr.f32.gmra.mxu0 %v232
        %v503 = vpop.f32.mrf.mxu0
        %v504 = vadd.f32 0.0, %v503
        %v505 = vpop.f32.mrf.mxu0
        %506 = vmatprep.mubr.f32.mxu0 %v237
        %507 = vmatmul.mubr.f32.gmra.mxu0 %v236
        %v508 = vpop.f32.mrf.mxu0
        %v509 = vadd.f32 0.0, %v508
        %v510 = vpop.f32.mrf.mxu0
        %511 = vmatprep.mubr.f32.mxu0 %v241
        %512 = vmatmul.mubr.f32.gmra.mxu0 %v240
        %v513 = vpop.f32.mrf.mxu0
        %v514 = vadd.f32 0.0, %v513
        %v515 = vpop.f32.mrf.mxu0
        %516 = vmatprep.mubr.f32.mxu0 %v245
        %517 = vmatmul.mubr.f32.gmra.mxu0 %v244
        %v518 = vpop.f32.mrf.mxu0
        %v519 = vadd.f32 0.0, %v518
        %v520 = vpop.f32.mrf.mxu0
        %521 = vmatprep.mubr.f32.mxu0 %v249
        %522 = vmatmul.mubr.f32.gmra.mxu0 %v248
        %v523 = vpop.f32.mrf.mxu0
        %v524 = vadd.f32 0.0, %v523
        %v525 = vpop.f32.mrf.mxu0
        %526 = vmatprep.mubr.f32.mxu0 %v253
        %527 = vmatmul.mubr.f32.gmra.mxu0 %v252
        %v528 = vpop.f32.mrf.mxu0
        %v529 = vadd.f32 0.0, %v528
        %v530 = vpop.f32.mrf.mxu0
        %531 = vmatprep.mubr.f32.mxu0 %v257
        %532 = vmatmul.mubr.f32.gmra.mxu0 %v256
        %v533 = vpop.f32.mrf.mxu0
        %v534 = vadd.f32 0.0, %v533
        %v535 = vpop.f32.mrf.mxu0
        %536 = vmatprep.mubr.f32.mxu0 %v261
        %537 = vmatmul.mubr.f32.gmra.mxu0 %v260
        %v538 = vpop.f32.mrf.mxu0
        %v539 = vadd.f32 0.0, %v538
        %v540 = vpop.f32.mrf.mxu0
        %541 = vmatprep.mubr.f32.mxu0 %v265
        %542 = vmatmul.mubr.f32.gmra.mxu0 %v264
        %v543 = vpop.f32.mrf.mxu0
        %v544 = vadd.f32 0.0, %v543
        %v545 = vpop.f32.mrf.mxu0
        %546 = vmatprep.mubr.f32.mxu0 %v269
        %547 = vmatmul.mubr.f32.gmra.mxu0 %v268
        %v548 = vpop.f32.mrf.mxu0
        %v549 = vadd.f32 0.0, %v548
        %v550 = vpop.f32.mrf.mxu0
        %551 = vmatprep.mubr.f32.mxu0 %v273
        %552 = vmatmul.mubr.f32.gmra.mxu0 %v272
        %v553 = vpop.f32.mrf.mxu0
        %v554 = vadd.f32 0.0, %v553
        %v555 = vpop.f32.mrf.mxu0
        %556 = vmatprep.mubr.f32.mxu0 %v277
        %557 = vmatmul.mubr.f32.gmra.mxu0 %v276
        %v558 = vpop.f32.mrf.mxu0
        %v559 = vadd.f32 0.0, %v558
        %v560 = vpop.f32.mrf.mxu0
        %561 = vmatprep.mubr.f32.mxu0 %v281
        %562 = vmatmul.mubr.f32.gmra.mxu0 %v280
        %v563 = vpop.f32.mrf.mxu0
        %v564 = vadd.f32 0.0, %v563
        %v565 = vpop.f32.mrf.mxu0
        %566 = vmatprep.mubr.f32.mxu0 %v285
        %567 = vmatmul.mubr.f32.gmra.mxu0 %v284
        %v568 = vpop.f32.mrf.mxu0
        %v569 = vadd.f32 0.0, %v568
        %v570 = vpop.f32.mrf.mxu0
        %571 = vmatprep.mubr.f32.mxu0 %v289
        %572 = vmatmul.mubr.f32.gmra.mxu0 %v288
        %v573 = vpop.f32.mrf.mxu0
        %v574 = vadd.f32 0.0, %v573
        %v575 = vpop.f32.mrf.mxu0
        %576 = vmatprep.mubr.f32.mxu0 %v293
        %577 = vmatmul.mubr.f32.gmra.mxu0 %v292
        %v578 = vpop.f32.mrf.mxu0
        %v579 = vadd.f32 0.0, %v578
        %v580 = vpop.f32.mrf.mxu0
        %581 = vmatprep.mubr.f32.mxu0 %v297
        %582 = vmatmul.mubr.f32.gmra.mxu0 %v296
        %v583 = vpop.f32.mrf.mxu0
        %v584 = vadd.f32 0.0, %v583
        %v585 = vpop.f32.mrf.mxu0
        %586 = vmatprep.mubr.f32.mxu0 %v301
        %587 = vmatmul.mubr.f32.gmra.mxu0 %v300
        %v588 = vpop.f32.mrf.mxu0
        %v589 = vadd.f32 0.0, %v588
        %v590 = vpop.f32.mrf.mxu0
        %591 = vmatprep.mubr.f32.mxu0 %v305
        %592 = vmatmul.mubr.f32.gmra.mxu0 %v304
        %v593 = vpop.f32.mrf.mxu0
        %v594 = vadd.f32 0.0, %v593
        %v595 = vpop.f32.mrf.mxu0
        %596 = vdwg.mxu0
        %597 = vmatprep.subr.mxu0 0.0
        %598 = vmatpush1.msra.mxu0 %v355
        %599 = vmatprep.subr.mxu0 0.0
        %600 = vmatpush1.msra.mxu0 %v354
        %601 = vmatprep.subr.mxu0 0.0
        %602 = vmatpush1.msra.mxu0 %v353
        %603 = vmatprep.subr.mxu0 0.0
        %604 = vmatpush1.msra.mxu0 %v352
        %605 = vmatprep.subr.mxu0 0.0
        %606 = vmatpush1.msra.mxu0 %v351
        %607 = vmatprep.subr.mxu0 0.0
        %608 = vmatpush1.msra.mxu0 %v350
        %609 = vmatprep.subr.mxu0 0.0
        %610 = vmatpush1.msra.mxu0 %v349
        %611 = vmatprep.subr.mxu0 0.0
        %612 = vmatpush1.msra.mxu0 %v348
        %613 = vmatprep.subr.mxu0 0.0
        %614 = vmatpush1.msra.mxu0 %v347
        %615 = vmatprep.subr.mxu0 0.0
        %616 = vmatpush1.msra.mxu0 %v346
        %617 = vmatprep.subr.mxu0 0.0
        %618 = vmatpush1.msra.mxu0 %v345
        %619 = vmatprep.subr.mxu0 0.0
        %620 = vmatpush1.msra.mxu0 %v344
        %621 = vmatprep.subr.mxu0 0.0
        %622 = vmatpush1.msra.mxu0 %v343
        %623 = vmatprep.subr.mxu0 0.0
        %624 = vmatpush1.msra.mxu0 %v342
        %625 = vmatprep.subr.mxu0 0.0
        %626 = vmatpush1.msra.mxu0 %v341
        %627 = vmatprep.subr.mxu0 0.0
        %628 = vmatpush1.msra.mxu0 %v340
        %629 = vmatprep.subr.mxu0 0.0
        %630 = vmatpush2.msra.mxu0 %v371
        %631 = vmatprep.subr.mxu0 0.0
        %632 = vmatpush2.msra.mxu0 %v370
        %633 = vmatprep.subr.mxu0 0.0
        %634 = vmatpush2.msra.mxu0 %v369
        %635 = vmatprep.subr.mxu0 0.0
        %636 = vmatpush2.msra.mxu0 %v368
        %637 = vmatprep.subr.mxu0 0.0
        %638 = vmatpush2.msra.mxu0 %v367
        %639 = vmatprep.subr.mxu0 0.0
        %640 = vmatpush2.msra.mxu0 %v366
        %641 = vmatprep.subr.mxu0 0.0
        %642 = vmatpush2.msra.mxu0 %v365
        %643 = vmatprep.subr.mxu0 0.0
        %644 = vmatpush2.msra.mxu0 %v364
        %645 = vmatprep.subr.mxu0 0.0
        %646 = vmatpush2.msra.mxu0 %v363
        %647 = vmatprep.subr.mxu0 0.0
        %648 = vmatpush2.msra.mxu0 %v362
        %649 = vmatprep.subr.mxu0 0.0
        %650 = vmatpush2.msra.mxu0 %v361
        %651 = vmatprep.subr.mxu0 0.0
        %652 = vmatpush2.msra.mxu0 %v360
        %653 = vmatprep.subr.mxu0 0.0
        %654 = vmatpush2.msra.mxu0 %v359
        %655 = vmatprep.subr.mxu0 0.0
        %656 = vmatpush2.msra.mxu0 %v358
        %657 = vmatprep.subr.mxu0 0.0
        %658 = vmatpush2.msra.mxu0 %v357
        %659 = vmatprep.subr.mxu0 0.0
        %660 = vmatpush2.msra.mxu0 %v356
        %661 = vmatprep.mubr.f32.mxu0 %v183
        %662 = vmatmul.mubr.f32.gmra.mxu0 %v182
        %v663 = vpop.f32.mrf.mxu0
        %v664 = vadd.f32 %v439, %v663
        %v665 = vpop.f32.mrf.mxu0
        %666 = vmatprep.mubr.f32.mxu0 %v187
        %667 = vmatmul.mubr.f32.gmra.mxu0 %v186
        %v668 = vpop.f32.mrf.mxu0
        %v669 = vadd.f32 %v444, %v668
        %v670 = vpop.f32.mrf.mxu0
        %671 = vmatprep.mubr.f32.mxu0 %v191
        %672 = vmatmul.mubr.f32.gmra.mxu0 %v190
        %v673 = vpop.f32.mrf.mxu0
        %v674 = vadd.f32 %v449, %v673
        %v675 = vpop.f32.mrf.mxu0
        %676 = vmatprep.mubr.f32.mxu0 %v195
        %677 = vmatmul.mubr.f32.gmra.mxu0 %v194
        %v678 = vpop.f32.mrf.mxu0
        %v679 = vadd.f32 %v454, %v678
        %v680 = vpop.f32.mrf.mxu0
        %681 = vmatprep.mubr.f32.mxu0 %v199
        %682 = vmatmul.mubr.f32.gmra.mxu0 %v198
        %v683 = vpop.f32.mrf.mxu0
        %v684 = vadd.f32 %v459, %v683
        %v685 = vpop.f32.mrf.mxu0
        %686 = vmatprep.mubr.f32.mxu0 %v203
        %687 = vmatmul.mubr.f32.gmra.mxu0 %v202
        %v688 = vpop.f32.mrf.mxu0
        %v689 = vadd.f32 %v464, %v688
        %v690 = vpop.f32.mrf.mxu0
        %691 = vmatprep.mubr.f32.mxu0 %v207
        %692 = vmatmul.mubr.f32.gmra.mxu0 %v206
        %v693 = vpop.f32.mrf.mxu0
        %v694 = vadd.f32 %v469, %v693
        %v695 = vpop.f32.mrf.mxu0
        %696 = vmatprep.mubr.f32.mxu0 %v211
        %697 = vmatmul.mubr.f32.gmra.mxu0 %v210
        %v698 = vpop.f32.mrf.mxu0
        %v699 = vadd.f32 %v474, %v698
        %v700 = vpop.f32.mrf.mxu0
        %701 = vmatprep.mubr.f32.mxu0 %v215
        %702 = vmatmul.mubr.f32.gmra.mxu0 %v214
        %v703 = vpop.f32.mrf.mxu0
        %v704 = vadd.f32 %v479, %v703
        %v705 = vpop.f32.mrf.mxu0
        %706 = vmatprep.mubr.f32.mxu0 %v219
        %707 = vmatmul.mubr.f32.gmra.mxu0 %v218
        %v708 = vpop.f32.mrf.mxu0
        %v709 = vadd.f32 %v484, %v708
        %v710 = vpop.f32.mrf.mxu0
        %711 = vmatprep.mubr.f32.mxu0 %v223
        %712 = vmatmul.mubr.f32.gmra.mxu0 %v222
        %v713 = vpop.f32.mrf.mxu0
        %v714 = vadd.f32 %v489, %v713
        %v715 = vpop.f32.mrf.mxu0
        %716 = vmatprep.mubr.f32.mxu0 %v227
        %717 = vmatmul.mubr.f32.gmra.mxu0 %v226
        %v718 = vpop.f32.mrf.mxu0
        %v719 = vadd.f32 %v494, %v718
        %v720 = vpop.f32.mrf.mxu0
        %721 = vmatprep.mubr.f32.mxu0 %v231
        %722 = vmatmul.mubr.f32.gmra.mxu0 %v230
        %v723 = vpop.f32.mrf.mxu0
        %v724 = vadd.f32 %v499, %v723
        %v725 = vpop.f32.mrf.mxu0
        %726 = vmatprep.mubr.f32.mxu0 %v235
        %727 = vmatmul.mubr.f32.gmra.mxu0 %v234
        %v728 = vpop.f32.mrf.mxu0
        %v729 = vadd.f32 %v504, %v728
        %v730 = vpop.f32.mrf.mxu0
        %731 = vmatprep.mubr.f32.mxu0 %v239
        %732 = vmatmul.mubr.f32.gmra.mxu0 %v238
        %v733 = vpop.f32.mrf.mxu0
        %v734 = vadd.f32 %v509, %v733
        %v735 = vpop.f32.mrf.mxu0
        %736 = vmatprep.mubr.f32.mxu0 %v243
        %737 = vmatmul.mubr.f32.gmra.mxu0 %v242
        %v738 = vpop.f32.mrf.mxu0
        %v739 = vadd.f32 %v514, %v738
        %v740 = vpop.f32.mrf.mxu0
        %741 = vmatprep.mubr.f32.mxu0 %v247
        %742 = vmatmul.mubr.f32.gmra.mxu0 %v246
        %v743 = vpop.f32.mrf.mxu0
        %v744 = vadd.f32 %v519, %v743
        %v745 = vpop.f32.mrf.mxu0
        %746 = vmatprep.mubr.f32.mxu0 %v251
        %747 = vmatmul.mubr.f32.gmra.mxu0 %v250
        %v748 = vpop.f32.mrf.mxu0
        %v749 = vadd.f32 %v524, %v748
        %v750 = vpop.f32.mrf.mxu0
        %751 = vmatprep.mubr.f32.mxu0 %v255
        %752 = vmatmul.mubr.f32.gmra.mxu0 %v254
        %v753 = vpop.f32.mrf.mxu0
        %v754 = vadd.f32 %v529, %v753
        %v755 = vpop.f32.mrf.mxu0
        %756 = vmatprep.mubr.f32.mxu0 %v259
        %757 = vmatmul.mubr.f32.gmra.mxu0 %v258
        %v758 = vpop.f32.mrf.mxu0
        %v759 = vadd.f32 %v534, %v758
        %v760 = vpop.f32.mrf.mxu0
        %761 = vmatprep.mubr.f32.mxu0 %v263
        %762 = vmatmul.mubr.f32.gmra.mxu0 %v262
        %v763 = vpop.f32.mrf.mxu0
        %v764 = vadd.f32 %v539, %v763
        %v765 = vpop.f32.mrf.mxu0
        %766 = vmatprep.mubr.f32.mxu0 %v267
        %767 = vmatmul.mubr.f32.gmra.mxu0 %v266
        %v768 = vpop.f32.mrf.mxu0
        %v769 = vadd.f32 %v544, %v768
        %v770 = vpop.f32.mrf.mxu0
        %771 = vmatprep.mubr.f32.mxu0 %v271
        %772 = vmatmul.mubr.f32.gmra.mxu0 %v270
        %v773 = vpop.f32.mrf.mxu0
        %v774 = vadd.f32 %v549, %v773
        %v775 = vpop.f32.mrf.mxu0
        %776 = vmatprep.mubr.f32.mxu0 %v275
        %777 = vmatmul.mubr.f32.gmra.mxu0 %v274
        %v778 = vpop.f32.mrf.mxu0
        %v779 = vadd.f32 %v554, %v778
        %v780 = vpop.f32.mrf.mxu0
        %781 = vmatprep.mubr.f32.mxu0 %v279
        %782 = vmatmul.mubr.f32.gmra.mxu0 %v278
        %v783 = vpop.f32.mrf.mxu0
        %v784 = vadd.f32 %v559, %v783
        %v785 = vpop.f32.mrf.mxu0
        %786 = vmatprep.mubr.f32.mxu0 %v283
        %787 = vmatmul.mubr.f32.gmra.mxu0 %v282
        %v788 = vpop.f32.mrf.mxu0
        %v789 = vadd.f32 %v564, %v788
        %v790 = vpop.f32.mrf.mxu0
        %791 = vmatprep.mubr.f32.mxu0 %v287
        %792 = vmatmul.mubr.f32.gmra.mxu0 %v286
        %v793 = vpop.f32.mrf.mxu0
        %v794 = vadd.f32 %v569, %v793
        %v795 = vpop.f32.mrf.mxu0
        %796 = vmatprep.mubr.f32.mxu0 %v291
        %797 = vmatmul.mubr.f32.gmra.mxu0 %v290
        %v798 = vpop.f32.mrf.mxu0
        %v799 = vadd.f32 %v574, %v798
        %v800 = vpop.f32.mrf.mxu0
        %801 = vmatprep.mubr.f32.mxu0 %v295
        %802 = vmatmul.mubr.f32.gmra.mxu0 %v294
        %v803 = vpop.f32.mrf.mxu0
        %v804 = vadd.f32 %v579, %v803
        %v805 = vpop.f32.mrf.mxu0
        %806 = vmatprep.mubr.f32.mxu0 %v299
        %807 = vmatmul.mubr.f32.gmra.mxu0 %v298
        %v808 = vpop.f32.mrf.mxu0
        %v809 = vadd.f32 %v584, %v808
        %v810 = vpop.f32.mrf.mxu0
        %811 = vmatprep.mubr.f32.mxu0 %v303
        %812 = vmatmul.mubr.f32.gmra.mxu0 %v302
        %v813 = vpop.f32.mrf.mxu0
        %v814 = vadd.f32 %v589, %v813
        %v815 = vpop.f32.mrf.mxu0
        %816 = vmatprep.mubr.f32.mxu0 %v307
        %817 = vmatmul.mubr.f32.gmra.mxu0 %v306
        %v818 = vpop.f32.mrf.mxu0
        %v819 = vadd.f32 %v594, %v818
        %v820 = vpop.f32.mrf.mxu0
        %821 = vdwg.mxu0
        %822 = vst [vmem:[%s177] sm:$0xff] %v664
        %823 = vst [vmem:[%s177 + $0x8] sm:$0xff] %v669
        %824 = vst [vmem:[%s177 + $0x10] sm:$0xff] %v674
        %825 = vst [vmem:[%s177 + $0x18] sm:$0xff] %v679
        %826 = vst [vmem:[%s177 + $0x20] sm:$0xff] %v684
        %827 = vst [vmem:[%s177 + $0x28] sm:$0xff] %v689
        %828 = vst [vmem:[%s177 + $0x30] sm:$0xff] %v694
        %829 = vst [vmem:[%s177 + $0x38] sm:$0xff] %v699
        %830 = vst [vmem:[%s177 + $0x40] sm:$0xff] %v704
        %831 = vst [vmem:[%s177 + $0x48] sm:$0xff] %v709
        %832 = vst [vmem:[%s177 + $0x50] sm:$0xff] %v714
        %833 = vst [vmem:[%s177 + $0x58] sm:$0xff] %v719
        %834 = vst [vmem:[%s177 + $0x60] sm:$0xff] %v724
        %835 = vst [vmem:[%s177 + $0x68] sm:$0xff] %v729
        %836 = vst [vmem:[%s177 + $0x70] sm:$0xff] %v734
        %837 = vst [vmem:[%s177 + $0x78] sm:$0xff] %v739
        %838 = vst [vmem:[%s177 + $0x80] sm:$0xff] %v744
        %839 = vst [vmem:[%s177 + $0x88] sm:$0xff] %v749
        %840 = vst [vmem:[%s177 + $0x90] sm:$0xff] %v754
        %841 = vst [vmem:[%s177 + $0x98] sm:$0xff] %v759
        %842 = vst [vmem:[%s177 + $0xa0] sm:$0xff] %v764
        %843 = vst [vmem:[%s177 + $0xa8] sm:$0xff] %v769
        %844 = vst [vmem:[%s177 + $0xb0] sm:$0xff] %v774
        %845 = vst [vmem:[%s177 + $0xb8] sm:$0xff] %v779
        %846 = vst [vmem:[%s177 + $0xc0] sm:$0xff] %v784
        %847 = vst [vmem:[%s177 + $0xc8] sm:$0xff] %v789
        %848 = vst [vmem:[%s177 + $0xd0] sm:$0xff] %v794
        %849 = vst [vmem:[%s177 + $0xd8] sm:$0xff] %v799
        %850 = vst [vmem:[%s177 + $0xe0] sm:$0xff] %v804
        %851 = vst [vmem:[%s177 + $0xe8] sm:$0xff] %v809
        %852 = vst [vmem:[%s177 + $0xf0] sm:$0xff] %v814
        %853 = vst [vmem:[%s177 + $0xf8] sm:$0xff] %v819
        %s854 = sand.u32 %s75, 1
        %s855 = scalar_lea.sflag [#allocation4], %s854
        %s856 = sand.u32 %s75, 1
        %s857 = smul.addr %s856, 256
        %s858 = scalar_lea.vmem [#allocation7], %s857
        // Predicated region
        $region37: #{tpu_custom_call.1} parent=27 // pred_check
          %p859 = pneg %p85
        $region38: #{tpu_custom_call.1} parent=27 // pred_check_branch
          %861 = sbr.rel (%p859) target = $region40
        $region39: #{tpu_custom_call.1} parent=27 // pred_region
          %s862 = smul.u32 32, %s20
          %s864 = ssub.s32 4096, 4096
          %865 = vsyncadd %s855, %s864
          %s866 = smul.addr %s862, 128
          %s867 = scalar_lea.hbm %s2, %s866
          %s868 = sshll.u32 %s858, 4
          %s869 = int_to_ptr.vmem [resolvable:$true] %s868
          %874 = dma.vmem_to_hbm [thread:$0]  %s869, 4096, %s867, %s855, 128, 128, 8
        $region40: #{tpu_custom_call.1} parent=27 // pred_fallthru
          _
      $region28: #{tpu_custom_call.1} parent=5 // pred_fallthru
        _
      %p875 = scmp.le.s32.totalorder 2, %s15
      // Predicated region
      $region41: #{tpu_custom_call.1} parent=5 // pred_check
        %p876 = pneg %p875
      $region42: #{tpu_custom_call.1} parent=5 // pred_check_branch
        %878 = sbr.rel (%p876) target = $region44
      $region43: #{tpu_custom_call.1} parent=5 // pred_region
        %s879 = ssub.s32 %s15, 2
        // Predicated region
        $region45: #{tpu_custom_call.1} parent=43 // pred_check
          %p880 = pneg %p91
        $region46: #{tpu_custom_call.1} parent=43 // pred_check_branch
          %882 = sbr.rel (%p880) target = $region48
        $region47: #{tpu_custom_call.1} parent=43 // pred_region
          %s883 = sand.u32 %s76, 1
          %s884 = scalar_lea.sflag [#allocation4], %s883
          %s885 = sand.u32 %s76, 1
          %s886 = smul.addr %s885, 256
          %s887 = scalar_lea.vmem [#allocation7], %s886
          %888 = dma.done %s884, 4096
        $region48: #{tpu_custom_call.1} parent=43 // pred_fallthru
          _
      $region44: #{tpu_custom_call.1} parent=5 // pred_fallthru
        _
    $region6: #{tpu_custom_call.1} parent=1 // loop_footer
      %s19 = sadd.s32 1, %s15
    $region7: #{tpu_custom_call.1} parent=1 // loop_footer_branch
      %14 = sbr.rel target = $region3
    $region8: #{tpu_custom_call.1} parent=1 // loop_exit
      _
    %889 = vsyncpa [#allocation3], 1
    %s890 = scalar_lea.sflag [#allocation3], 1
    %891 = vsyncpa %s890, 1
    %892 = vsyncpa [#allocation6], 1
    %893 = vsyncpa [#allocation4], 1
    %s894 = scalar_lea.sflag [#allocation4], 1
    %895 = vsyncpa %s894, 1

</llo_original>
